<compile_context>
chip_gen: v7x
topology: tpu7x:2x2x1
jax: 0.10.0
libtpu: 0.0.40
codegen_flags: <defaults>
</compile_context>

<pallas_src>
import functools

import jax
import jax.numpy as jnp
from jax import lax
from jax.experimental import pallas as pl
from jax.experimental.pallas import tpu as pltpu

EPS = 1e-12      # christiancosgrove's l2normalize eps
LANE = 128


def _round_up(x, m):
    return (x + m - 1) // m * m


# ---------------------------------------------------------------------------
# Kernel 1: power iteration + sigma (one-shot, f32, hoisted off the hot path)
# ---------------------------------------------------------------------------
def _power_iter_kernel(power_iterations,
                       w2d_ref, u_ref, v_ref,
                       u_out_ref, v_out_ref, inv_sigma_ref):
    w2d = w2d_ref[...]                                   # [Cout, width] (torch view order)
    u = u_ref[...]                                       # [1, Cout]
    v = v_ref[...]                                       # [1, width]

    for _ in range(power_iterations):
        # v <- l2normalize(W^T u)   (computed as u @ W); rsqrt -> EUP slot
        wtu = jnp.dot(u, w2d, preferred_element_type=jnp.float32)         # [1, width]
        v = wtu * lax.rsqrt(jnp.maximum(jnp.sum(wtu * wtu), EPS * EPS))
        # u <- l2normalize(W v)     (computed as v @ W^T)
        wv = lax.dot_general(v, w2d, (((1,), (1,)), ((), ())),
                             preferred_element_type=jnp.float32)          # [1, Cout]
        u = wv * lax.rsqrt(jnp.maximum(jnp.sum(wv * wv), EPS * EPS))

    # sigma = u . (W v): recompute W v so power_iterations == 0 is also valid.
    wv = lax.dot_general(v, w2d, (((1,), (1,)), ((), ())),
                         preferred_element_type=jnp.float32)              # [1, Cout]
    sigma = jnp.sum(u * wv, keepdims=True)                                # [1, 1]

    u_out_ref[...] = u
    v_out_ref[...] = v
    inv_sigma_ref[...] = pl.reciprocal(sigma, approx=True)


# ---------------------------------------------------------------------------
# Kernel 2: tiled im2col conv matmul (bf16 MXU inputs, f32 accumulation)
# ---------------------------------------------------------------------------
def _conv_tile_kernel(patches_ref, wconv_ref, bias_ref, inv_sigma_ref, y_ref):
    inv_sigma = inv_sigma_ref[0, 0]                      # resident SMEM f32 scalar
    acc = jnp.dot(patches_ref[...], wconv_ref[...],      # bf16 x bf16 -> f32 on MXU
                  preferred_element_type=jnp.float32)
    # conv(x, w/sigma) + b  ==  (p @ w) * (1/sigma) + b   (bias not scaled)
    y_ref[...] = acc * inv_sigma + bias_ref[...]


# ---------------------------------------------------------------------------
# Generation-aware VMEM budget / tile sizing
# ---------------------------------------------------------------------------
def _vmem_budget_bytes():
    """VMEM budget with headroom: v7x has 64 MiB/TC, v5e/v6e have 128 MiB."""
    cap = None
    try:
        cap = getattr(pltpu.get_tpu_info(), "vmem_capacity_bytes", None)
    except Exception:
        cap = None
    if not cap:
        cap = 64 * 1024 * 1024                 # conservative (v7x-sized) fallback
    return int(min(cap * 3 // 4, 100 * 1024 * 1024))


def _auto_tile_m(m, width, cout_pad, vmem_budget):
    """Largest M-tile (multiple of 128) whose double-buffered in/out tiles plus
    the resident weight/bias fit comfortably in half the VMEM budget."""
    per_row = 2 * width * 2 + 2 * cout_pad * 4           # 2x bf16 patch buf + 2x f32 out buf
    resident = width * cout_pad * 2 + cout_pad * 4
    tile = (vmem_budget // 2 - resident) // max(per_row, 1)
    tile = int(max(128, min(tile, 2048)))
    tile -= tile % 128
    return max(128, min(tile, _round_up(m, 128)))


# ---------------------------------------------------------------------------
# Wrapper: SpectralNorm(Conv2d(stride=1, padding=1)) forward
# ---------------------------------------------------------------------------
def spectral_norm_conv2d(x, w_bar, bias, u, v, power_iterations=1,
                         tile_m=None, data_format="NCHW"):
    """Returns (y, u_new, v_new); y/x are NCHW (PyTorch) or NHWC per data_format."""
    assert power_iterations >= 0
    if data_format == "NCHW":
        x_nhwc = jnp.transpose(x, (0, 2, 3, 1))
    elif data_format == "NHWC":
        x_nhwc = x
    else:
        raise ValueError(f"bad data_format {data_format}")

    N, H, W, Cin = x_nhwc.shape
    Cout, Cin_w, kH, kW = w_bar.shape
    assert Cin == Cin_w
    width = Cin * kH * kW

    # ---- stage 1: power iteration + sigma (f32, unpadded shapes) ------------
    w2d = w_bar.reshape(Cout, width).astype(jnp.float32)   # torch w.view(Cout, -1)
    vmem = pl.BlockSpec(memory_space=pltpu.MemorySpace.VMEM)
    u_new, v_new, inv_sigma = pl.pallas_call(
        functools.partial(_power_iter_kernel, power_iterations),
        out_shape=(jax.ShapeDtypeStruct((1, Cout), jnp.float32),
                   jax.ShapeDtypeStruct((1, width), jnp.float32),
                   jax.ShapeDtypeStruct((1, 1), jnp.float32)),
        in_specs=[vmem, vmem, vmem],
        out_specs=(vmem, vmem, vmem),
    )(w2d, u.reshape(1, Cout).astype(jnp.float32),
      v.reshape(1, width).astype(jnp.float32))

    # ---- stage 2: conv as a tiled im2col matmul ------------------------------
    # TODO(synk): fold im2col into the kernel (kh/kw reduction over shifted NHWC
    # windows) to remove the kH*kW x HBM blow-up of the materialized patch matrix.
    x_bf16 = x_nhwc.astype(jnp.bfloat16)                   # bf16 MXU inputs, f32 accum
    x_pad = jnp.pad(x_bf16, ((0, 0), (1, 1), (1, 1), (0, 0)))
    slices = [x_pad[:, kh:kh + H, kw:kw + W, :]
              for kh in range(kH) for kw in range(kW)]
    patches = jnp.concatenate(slices, axis=-1).reshape(N * H * W, width)

    # conv weight matrix, rows ordered (kh, kw, cin) to match patch columns.
    w_conv = jnp.transpose(w_bar, (2, 3, 1, 0)).reshape(width, Cout)

    # lane-dense output: zero-pad Cout (weight columns + bias) up to 128.
    cout_pad = _round_up(Cout, LANE)
    w_conv = jnp.pad(w_conv, ((0, 0), (0, cout_pad - Cout))).astype(jnp.bfloat16)
    bias_p = jnp.pad(bias.astype(jnp.float32).reshape(1, Cout),
                     ((0, 0), (0, cout_pad - Cout)))

    M = N * H * W
    vmem_budget = _vmem_budget_bytes()
    if tile_m is None:
        tile_m = _auto_tile_m(M, width, cout_pad, vmem_budget)
    assert tile_m % 8 == 0
    m_pad = _round_up(M, tile_m)
    if m_pad != M:
        patches = jnp.pad(patches, ((0, m_pad - M), (0, 0)))

    grid = (m_pad // tile_m,)
    y_flat = pl.pallas_call(
        _conv_tile_kernel,
        out_shape=jax.ShapeDtypeStruct((m_pad, cout_pad), jnp.float32),
        grid=grid,
        in_specs=[
            pl.BlockSpec((tile_m, width), lambda i: (i, 0)),      # streamed patches
            pl.BlockSpec((width, cout_pad), lambda i: (0, 0)),    # resident weight
            pl.BlockSpec((1, cout_pad), lambda i: (0, 0)),        # resident bias
            pl.BlockSpec(memory_space=pltpu.MemorySpace.SMEM),    # 1/sigma scalar
        ],
        out_specs=pl.BlockSpec((tile_m, cout_pad), lambda i: (i, 0)),
        compiler_params=pltpu.CompilerParams(
            dimension_semantics=("parallel",),                    # v7x: both TCs
            vmem_limit_bytes=vmem_budget),
    )(patches, w_conv, bias_p, inv_sigma)

    y_nhwc = y_flat[:M, :Cout].reshape(N, H, W, Cout)
    y_out = jnp.transpose(y_nhwc, (0, 3, 1, 2)) if data_format == "NCHW" else y_nhwc
    return y_out, u_new.reshape(Cout), v_new.reshape(width)


# ---------------------------------------------------------------------------
# Pure-JAX reference (correctness check)
# ---------------------------------------------------------------------------
def _l2normalize(t):
    return t / (jnp.linalg.norm(t) + EPS)


def _reference_uv_sigma(w_bar, u, v, power_iterations=1):
    Cout = w_bar.shape[0]
    w2d = w_bar.reshape(Cout, -1)
    for _ in range(power_iterations):
        v = _l2normalize(w2d.T @ u)
        u = _l2normalize(w2d @ v)
    sigma = u @ (w2d @ v)
    return u, v, sigma


def _reference_forward(x, w_bar, bias, u, v, power_iterations=1):
    u1, v1, sigma = _reference_uv_sigma(w_bar, u, v, power_iterations)
    wn = w_bar / sigma
    y = lax.conv_general_dilated(x, wn, window_strides=(1, 1),
                                 padding=((1, 1), (1, 1)),
                                 dimension_numbers=('NCHW', 'OIHW', 'NCHW'))
    return y + bias.reshape(1, -1, 1, 1), u1, v1


if __name__ == "__main__":
    key = jax.random.PRNGKey(0)
    k_x, k_w, k_b, k_u, k_v = jax.random.split(key, 5)

    # SpectralNorm wraps Conv2d(in=4, out=8, kernel=3, stride=1, padding=1).
    N, Cin, H, W = 2, 4, 16, 16
    Cout, kH, kW = 8, 3, 3
    width = Cin * kH * kW

    x = jax.random.normal(k_x, (N, Cin, H, W), jnp.float32)
    # Deterministic synthetic init (stands in for tl.init_weights; not a checkpoint).
    w_bar = jax.random.normal(k_w, (Cout, Cin, kH, kW), jnp.float32) * 0.1
    bias = jax.random.normal(k_b, (Cout,), jnp.float32) * 0.1
    u0 = _l2normalize(jax.random.normal(k_u, (Cout,), jnp.float32))
    v0 = _l2normalize(jax.random.normal(k_v, (width,), jnp.float32))

    # tile_m=128 -> 4-step grid over M = N*H*W = 512 (exercises the pipeline).
    y, u_new, v_new = spectral_norm_conv2d(x, w_bar, bias, u0, v0,
                                           power_iterations=1, tile_m=128)
    jax.block_until_ready((y, u_new, v_new))

    y_ref, u_ref, v_ref = _reference_forward(x, w_bar, bias, u0, v0,
                                             power_iterations=1)
    assert y.shape == (N, Cout, H, W)
    # bf16 MXU inputs (f32 accumulation) + approx 1/sigma loosen agreement
    # slightly vs the pure-f32 reference; 2e-2 comfortably covers it.
    assert bool(jnp.allclose(y, y_ref, rtol=2e-2, atol=2e-2)), "y mismatch vs reference"
    assert bool(jnp.allclose(u_new, u_ref, rtol=1e-4, atol=1e-4)), "u mismatch"
    assert bool(jnp.allclose(v_new, v_ref, rtol=1e-4, atol=1e-4)), "v mismatch"

    print("KERNEL_OK")
</pallas_src>

<mosaic_0001>
module attributes {stable_mosaic.version = 11 : i64} {
  func.func @_power_iter_kernel(%arg0: memref<8x36xf32, #tpu.memory_space<vmem>>, %arg1: memref<1x8xf32, #tpu.memory_space<vmem>>, %arg2: memref<1x36xf32, #tpu.memory_space<vmem>>, %arg3: memref<1x8xf32, #tpu.memory_space<vmem>>, %arg4: memref<1x36xf32, #tpu.memory_space<vmem>>, %arg5: memref<1x1xf32, #tpu.memory_space<vmem>>) attributes {dimension_semantics = [], scalar_prefetch = 0 : i64, scratch_operands = 0 : i64, tpu.core_type = #tpu.core_type<tc>} {
    %c0 = arith.constant 0 : index
    %c0_0 = arith.constant 0 : index
    %0 = vector.load %arg0[%c0, %c0_0] : memref<8x36xf32, #tpu.memory_space<vmem>>, vector<8x36xf32>
    %c0_1 = arith.constant 0 : index
    %c0_2 = arith.constant 0 : index
    %1 = vector.load %arg1[%c0_1, %c0_2] : memref<1x8xf32, #tpu.memory_space<vmem>>, vector<1x8xf32>
    %cst = arith.constant dense<0.000000e+00> : vector<1x36xf32>
    %2 = tpu.matmul %1, %0, %cst {dimension_numbers = #tpu.dot_dimension_numbers<[1], [0], [0], [1], [0, 0, 1, 1], [], []>} : vector<1x8xf32>, vector<8x36xf32>, vector<1x36xf32> -> vector<1x36xf32>
    %3 = arith.mulf %2, %2 : vector<1x36xf32>
    %4 = vector.shape_cast %3 : vector<1x36xf32> to vector<1x1x36xf32>
    %cst_3 = arith.constant dense<0.000000e+00> : vector<1xf32>
    %5 = vector.multi_reduction <add>, %4, %cst_3 [1, 2] : vector<1x1x36xf32> to vector<1xf32>
    %6 = vector.shape_cast %5 : vector<1xf32> to vector<1x1x1xf32>
    %7 = vector.extract %6[0, 0, 0] : f32 from vector<1x1x1xf32>
    %cst_4 = arith.constant 1.000000e-24 : f32
    %8 = arith.maximumf %7, %cst_4 : f32
    %9 = math.rsqrt %8 : f32
    %10 = vector.broadcast %9 : f32 to vector<1x36xf32>
    %11 = arith.mulf %2, %10 : vector<1x36xf32>
    %cst_5 = arith.constant dense<0.000000e+00> : vector<1x8xf32>
    %12 = tpu.matmul %11, %0, %cst_5 {dimension_numbers = #tpu.dot_dimension_numbers<[1], [1], [0], [0], [0, 0, 1, 0], [], []>} : vector<1x36xf32>, vector<8x36xf32>, vector<1x8xf32> -> vector<1x8xf32>
    %13 = arith.mulf %12, %12 : vector<1x8xf32>
    %14 = vector.shape_cast %13 : vector<1x8xf32> to vector<1x1x8xf32>
    %cst_6 = arith.constant dense<0.000000e+00> : vector<1xf32>
    %15 = vector.multi_reduction <add>, %14, %cst_6 [1, 2] : vector<1x1x8xf32> to vector<1xf32>
    %16 = vector.shape_cast %15 : vector<1xf32> to vector<1x1x1xf32>
    %17 = vector.extract %16[0, 0, 0] : f32 from vector<1x1x1xf32>
    %cst_7 = arith.constant 1.000000e-24 : f32
    %18 = arith.maximumf %17, %cst_7 : f32
    %19 = math.rsqrt %18 : f32
    %20 = vector.broadcast %19 : f32 to vector<1x8xf32>
    %21 = arith.mulf %12, %20 : vector<1x8xf32>
    %cst_8 = arith.constant dense<0.000000e+00> : vector<1x8xf32>
    %22 = tpu.matmul %11, %0, %cst_8 {dimension_numbers = #tpu.dot_dimension_numbers<[1], [1], [0], [0], [0, 0, 1, 0], [], []>} : vector<1x36xf32>, vector<8x36xf32>, vector<1x8xf32> -> vector<1x8xf32>
    %23 = arith.mulf %21, %22 : vector<1x8xf32>
    %24 = vector.shape_cast %23 : vector<1x8xf32> to vector<1x1x8xf32>
    %cst_9 = arith.constant dense<0.000000e+00> : vector<1xf32>
    %25 = vector.multi_reduction <add>, %24, %cst_9 [1, 2] : vector<1x1x8xf32> to vector<1xf32>
    %26 = vector.shape_cast %25 : vector<1xf32> to vector<1x1x1xf32>
    %27 = vector.extract %26[0, 0, 0] : f32 from vector<1x1x1xf32>
    %28 = vector.broadcast %27 : f32 to vector<1x1xf32>
    %c0_10 = arith.constant 0 : index
    %c0_11 = arith.constant 0 : index
    %29 = vector.load %arg3[%c0_10, %c0_11] : memref<1x8xf32, #tpu.memory_space<vmem>>, vector<1x8xf32>
    tpu.vector_store %arg3[%c0_10, %c0_11], %21 {strides = array<i32>} : memref<1x8xf32, #tpu.memory_space<vmem>>, vector<1x8xf32>,
    %c0_12 = arith.constant 0 : index
    %c0_13 = arith.constant 0 : index
    %30 = vector.load %arg4[%c0_12, %c0_13] : memref<1x36xf32, #tpu.memory_space<vmem>>, vector<1x36xf32>
    tpu.vector_store %arg4[%c0_12, %c0_13], %11 {strides = array<i32>} : memref<1x36xf32, #tpu.memory_space<vmem>>, vector<1x36xf32>,
    %31 = tpu.reciprocal %28 {approx = true} : vector<1x1xf32> -> vector<1x1xf32>
    %c0_14 = arith.constant 0 : index
    %c0_15 = arith.constant 0 : index
    %32 = vector.load %arg5[%c0_14, %c0_15] : memref<1x1xf32, #tpu.memory_space<vmem>>, vector<1x1xf32>
    tpu.vector_store %arg5[%c0_14, %c0_15], %31 {strides = array<i32>} : memref<1x1xf32, #tpu.memory_space<vmem>>, vector<1x1xf32>,
    return
  }
}

</mosaic_0001>

<llo_original>
// kernel: tpu_custom_call.1
$region0: #{tpu_custom_call.1}
  #allocation0 [shape = 'u32[]', space=smem, size = 0x4, offset = 0x4, fixed_abs, tag = 'smem constant byte address 0x4 - core index']
  #allocation1 [shape = 'u32[144,128]{1,0:T(1,128)}', space=vmem, size = 0x12000, scoped, tag = 'internal scratch']
  %s0 = inlined_call_operand.hbm [shape: f32[8,36], index: 0, kind: input, shape index: {}]
  %s1 = inlined_call_operand.vmem [shape: f32[1,8], index: 1, kind: input, shape index: {}]
  %s2 = inlined_call_operand.vmem [shape: f32[1,36], index: 2, kind: input, shape index: {}]
  %s3 = inlined_call_operand.hbm [shape: f32[1,8], index: 3, kind: output, shape index: {0}]
  %s4 = inlined_call_operand.hbm [shape: f32[1,36], index: 4, kind: output, shape index: {1}]
  %s5 = inlined_call_operand.hbm [shape: f32[1,1], index: 5, kind: output, shape index: {2}]
  %6 = xla_tuple %s3, %s4, %s5
  %s7 = sld [smem:[#allocation0]]
  $region42: #{tpu_custom_call.1} parent=0
    _
  %s9 = ssub.s32 1, %s7
  %s10 = scalar_select 0, %s9, %s7
  $region1: #{tpu_custom_call.1} parent=0
    #allocation2 [shape = 'u8[4096]{0}', space=vmem, size = 0x1000, scoped, tag = 'input window, operand 0, single buffered']
    #allocation3 [shape = 's32[1]{0}', space=sflag, size = 0x4, scoped, tag = 'scoped memory for tpu_custom_call.1']
    #allocation4 [shape = 's32[1]{0}', space=sflag, size = 0x4, scoped, tag = 'scoped memory for tpu_custom_call.1']
    #allocation5 [shape = 'u8[512]{0}', space=vmem, size = 0x400, scoped, tag = 'output window, operand 0, single buffered']
    #allocation6 [shape = 'u8[512]{0}', space=vmem, size = 0x400, scoped, tag = 'output window, operand 1, single buffered']
    #allocation7 [shape = 's32[1]{0}', space=sflag, size = 0x4, scoped, tag = 'scoped memory for tpu_custom_call.1']
    #allocation8 [shape = 'u8[512]{0}', space=vmem, size = 0x400, scoped, tag = 'output window, operand 2, single buffered']
    %11 = vsyncpa [#allocation3], 0
    %12 = vsyncpa [#allocation4], 0
    %13 = vsyncpa [#allocation7], 0
    // Predicated region
    $region2: #{tpu_custom_call.1} parent=1 // pred_check
      _
    $region3: #{tpu_custom_call.1} parent=1 // pred_check_branch
      %15 = sbr.rel (0) target = $region5
    $region4: #{tpu_custom_call.1} parent=1 // pred_region
      %s17 = ssub.s32 128, 128
      %18 = vsyncadd [#allocation3], %s17
      %s20 = sshll.u32 [#allocation2], 4
      %s21 = int_to_ptr.vmem [resolvable:$true] %s20
      %23 = dma.hbm_to_vmem [thread:$0]  %s0, 128, %s21, [#allocation3]
    $region5: #{tpu_custom_call.1} parent=1 // pred_fallthru
      _
    // Predicated region
    $region6: #{tpu_custom_call.1} parent=1 // pred_check
      _
    $region7: #{tpu_custom_call.1} parent=1 // pred_check_branch
      %25 = sbr.rel (0) target = $region9
    $region8: #{tpu_custom_call.1} parent=1 // pred_region
      _
    $region9: #{tpu_custom_call.1} parent=1 // pred_fallthru
      _
    // Predicated region
    $region10: #{tpu_custom_call.1} parent=1 // pred_check
      _
    $region11: #{tpu_custom_call.1} parent=1 // pred_check_branch
      %27 = sbr.rel (0) target = $region13
    $region12: #{tpu_custom_call.1} parent=1 // pred_region
      _
    $region13: #{tpu_custom_call.1} parent=1 // pred_fallthru
      _
    // Predicated region
    $region14: #{tpu_custom_call.1} parent=1 // pred_check
      _
    $region15: #{tpu_custom_call.1} parent=1 // pred_check_branch
      %29 = sbr.rel (0) target = $region17
    $region16: #{tpu_custom_call.1} parent=1 // pred_region
      %30 = dma.done [#allocation3], 128
    $region17: #{tpu_custom_call.1} parent=1 // pred_fallthru
      _
    %v31 = vld [vmem:[#allocation2] sm:$0xff]
    %v32 = vld [vmem:[%s1] sm:$0x1]
    %vm33 = vcmask 64512
    %v35 = vsel %vm33, %v32, 0
    %37 = vmatprep.subr.mxu0 0.0
    %38 = vmatpush1.msra.mxu0 %v31
    %39 = vmatprep.subr.mxu0 0.0
    %40 = vmatpush1.msra.mxu0 0.0
    %41 = vmatprep.subr.mxu0 0.0
    %42 = vmatpush1.msra.mxu0 0.0
    %43 = vmatprep.subr.mxu0 0.0
    %44 = vmatpush1.msra.mxu0 0.0
    %45 = vmatprep.subr.mxu0 0.0
    %46 = vmatpush1.msra.mxu0 0.0
    %47 = vmatprep.subr.mxu0 0.0
    %48 = vmatpush1.msra.mxu0 0.0
    %49 = vmatprep.subr.mxu0 0.0
    %50 = vmatpush1.msra.mxu0 0.0
    %51 = vmatprep.subr.mxu0 0.0
    %52 = vmatpush1.msra.mxu0 0.0
    %53 = vmatprep.subr.mxu0 0.0
    %54 = vmatpush1.msra.mxu0 0.0
    %55 = vmatprep.subr.mxu0 0.0
    %56 = vmatpush1.msra.mxu0 0.0
    %57 = vmatprep.subr.mxu0 0.0
    %58 = vmatpush1.msra.mxu0 0.0
    %59 = vmatprep.subr.mxu0 0.0
    %60 = vmatpush1.msra.mxu0 0.0
    %61 = vmatprep.subr.mxu0 0.0
    %62 = vmatpush1.msra.mxu0 0.0
    %63 = vmatprep.subr.mxu0 0.0
    %64 = vmatpush1.msra.mxu0 0.0
    %65 = vmatprep.subr.mxu0 0.0
    %66 = vmatpush1.msra.mxu0 0.0
    %67 = vmatprep.subr.mxu0 0.0
    %68 = vmatpush1.msra.mxu0 0.0
    %69 = vmatprep.subr.mxu0 0.0
    %70 = vmatpush1.msra.mxu0 0.0
    %71 = vmatprep.subr.mxu0 0.0
    %72 = vmatpush1.msra.mxu0 0.0
    %73 = vmatprep.subr.mxu0 0.0
    %74 = vmatpush1.msra.mxu0 0.0
    %75 = vmatprep.subr.mxu0 0.0
    %76 = vmatpush1.msra.mxu0 0.0
    %77 = vmatprep.subr.mxu0 0.0
    %78 = vmatpush1.msra.mxu0 0.0
    %79 = vmatprep.subr.mxu0 0.0
    %80 = vmatpush1.msra.mxu0 0.0
    %81 = vmatprep.subr.mxu0 0.0
    %82 = vmatpush1.msra.mxu0 0.0
    %83 = vmatprep.subr.mxu0 0.0
    %84 = vmatpush1.msra.mxu0 0.0
    %85 = vmatprep.subr.mxu0 0.0
    %86 = vmatpush1.msra.mxu0 0.0
    %87 = vmatprep.subr.mxu0 0.0
    %88 = vmatpush1.msra.mxu0 0.0
    %89 = vmatprep.subr.mxu0 0.0
    %90 = vmatpush1.msra.mxu0 0.0
    %91 = vmatprep.subr.mxu0 0.0
    %92 = vmatpush1.msra.mxu0 0.0
    %93 = vmatprep.subr.mxu0 0.0
    %94 = vmatpush1.msra.mxu0 0.0
    %95 = vmatprep.subr.mxu0 0.0
    %96 = vmatpush1.msra.mxu0 0.0
    %97 = vmatprep.subr.mxu0 0.0
    %98 = vmatpush1.msra.mxu0 0.0
    %99 = vmatprep.subr.mxu0 0.0
    %100 = vmatpush1.msra.mxu0 0.0
    %101 = vmatprep.mubr.f32.mxu0 0.0
    %102 = vmatmul.mubr.f32.gmra.mrb[0].mxu0 %v35
    %v103 = vpop.f32.mrb[0].mxu0
    %v104 = vadd.f32 0.0, %v103
    %v105 = vpop.f32.mrb[0].mxu0
    %106 = vdwg.mxu0
    %v107 = vmul.f32 %v104, %v104
    %vm108 = vcmask 286720
    %v109 = vsel %vm108, %v107, 0.0
    %110 = vadd.xlane.f32.xlu0 %v109
    %v111 = vpop.xlane.xlu0 %110
    %v112 = vrot.slane %v111, 4
    %v113 = vadd.f32 %v111, %v112
    %v114 = vrot.slane %v113, 2
    %v115 = vadd.f32 %v113, %v114
    %v116 = vrot.slane %v115, 1
    %v117 = vadd.f32 %v115, %v116
    %s118 = vtos %v117
    %s119 = smax.f32 %s118, 1e-24
    %v120 = vstv %s119
    %v121 = vrsqrt.pop %v120
    %s122 = vtos %v121
    %v123 = vstv %s122
    %v124 = vmul.f32 %v104, %v123
    %vm125 = vcmask 293888
    %v127 = vsel %vm125, %v124, 0
    %v130 = vsel %vm125, %v31, 0
    %132 = vmatprep.subr.mxu0 0.0
    %133 = vmatpush1.xpose.msra.mxu0 %v130
    %134 = vmatprep.subr.mxu0 0.0
    %135 = vmatpush1.xpose.msra.mxu0 0.0
    %136 = vmatprep.subr.mxu0 0.0
    %137 = vmatpush1.xpose.msra.mxu0 0.0
    %138 = vmatprep.subr.mxu0 0.0
    %139 = vmatpush1.xpose.msra.mxu0 0.0
    %140 = vmatprep.subr.mxu0 0.0
    %141 = vmatpush1.xpose.msra.mxu0 0.0
    %142 = vmatprep.subr.mxu0 0.0
    %143 = vmatpush1.xpose.msra.mxu0 0.0
    %144 = vmatprep.subr.mxu0 0.0
    %145 = vmatpush1.xpose.msra.mxu0 0.0
    %146 = vmatprep.subr.mxu0 0.0
    %147 = vmatpush1.xpose.msra.mxu0 0.0
    %148 = vmatprep.subr.mxu0 0.0
    %149 = vmatpush1.xpose.msra.mxu0 0.0
    %150 = vmatprep.subr.mxu0 0.0
    %151 = vmatpush1.xpose.msra.mxu0 0.0
    %152 = vmatprep.subr.mxu0 0.0
    %153 = vmatpush1.xpose.msra.mxu0 0.0
    %154 = vmatprep.subr.mxu0 0.0
    %155 = vmatpush1.xpose.msra.mxu0 0.0
    %156 = vmatprep.subr.mxu0 0.0
    %157 = vmatpush1.xpose.msra.mxu0 0.0
    %158 = vmatprep.subr.mxu0 0.0
    %159 = vmatpush1.xpose.msra.mxu0 0.0
    %160 = vmatprep.subr.mxu0 0.0
    %161 = vmatpush1.xpose.msra.mxu0 0.0
    %162 = vmatprep.subr.mxu0 0.0
    %163 = vmatpush1.xpose.msra.mxu0 0.0
    %164 = vmatprep.subr.mxu0 0.0
    %165 = vmatpush1.xpose.msra.mxu0 0.0
    %166 = vmatprep.subr.mxu0 0.0
    %167 = vmatpush1.xpose.msra.mxu0 0.0
    %168 = vmatprep.subr.mxu0 0.0
    %169 = vmatpush1.xpose.msra.mxu0 0.0
    %170 = vmatprep.subr.mxu0 0.0
    %171 = vmatpush1.xpose.msra.mxu0 0.0
    %172 = vmatprep.subr.mxu0 0.0
    %173 = vmatpush1.xpose.msra.mxu0 0.0
    %174 = vmatprep.subr.mxu0 0.0
    %175 = vmatpush1.xpose.msra.mxu0 0.0
    %176 = vmatprep.subr.mxu0 0.0
    %177 = vmatpush1.xpose.msra.mxu0 0.0
    %178 = vmatprep.subr.mxu0 0.0
    %179 = vmatpush1.xpose.msra.mxu0 0.0
    %180 = vmatprep.subr.mxu0 0.0
    %181 = vmatpush1.xpose.msra.mxu0 0.0
    %182 = vmatprep.subr.mxu0 0.0
    %183 = vmatpush1.xpose.msra.mxu0 0.0
    %184 = vmatprep.subr.mxu0 0.0
    %185 = vmatpush1.xpose.msra.mxu0 0.0
    %186 = vmatprep.subr.mxu0 0.0
    %187 = vmatpush1.xpose.msra.mxu0 0.0
    %188 = vmatprep.subr.mxu0 0.0
    %189 = vmatpush1.xpose.msra.mxu0 0.0
    %190 = vmatprep.subr.mxu0 0.0
    %191 = vmatpush1.xpose.msra.mxu0 0.0
    %192 = vmatprep.subr.mxu0 0.0
    %193 = vmatpush1.xpose.msra.mxu0 0.0
    %194 = vmatprep.subr.mxu0 0.0
    %195 = vmatpush1.xpose.msra.mxu0 0.0
    %196 = vmatprep.mubr.f32.mxu0 0.0
    %197 = vmatmul.mubr.f32.gmra.mrb[0].mxu0 %v127
    %v198 = vpop.f32.mrb[0].mxu0
    %v199 = vadd.f32 0.0, %v198
    %v200 = vpop.f32.mrb[0].mxu0
    %201 = vdwg.mxu0
    %v202 = vmul.f32 %v199, %v199
    %vm203 = vcmask 57344
    %v204 = vsel %vm203, %v202, 0.0
    %205 = vadd.xlane.f32.xlu0 %v204
    %v206 = vpop.xlane.xlu0 %205
    %v207 = vrot.slane %v206, 4
    %v208 = vadd.f32 %v206, %v207
    %v209 = vrot.slane %v208, 2
    %v210 = vadd.f32 %v208, %v209
    %v211 = vrot.slane %v210, 1
    %v212 = vadd.f32 %v210, %v211
    %s213 = vtos %v212
    %s214 = smax.f32 %s213, 1e-24
    %v215 = vstv %s214
    %v216 = vrsqrt.pop %v215
    %s217 = vtos %v216
    %v218 = vstv %s217
    %v219 = vmul.f32 %v199, %v218
    %v220 = vmul.f32 %v219, %v199
    %v221 = vsel %vm203, %v220, 0.0
    %222 = vadd.xlane.f32.xlu0 %v221
    %v223 = vpop.xlane.xlu0 %222
    %v224 = vrot.slane %v223, 4
    %v225 = vadd.f32 %v223, %v224
    %v226 = vrot.slane %v225, 2
    %v227 = vadd.f32 %v225, %v226
    %v228 = vrot.slane %v227, 1
    %v229 = vadd.f32 %v227, %v228
    %s230 = vtos %v229
    %v231 = vstv %s230
    %232 = vst.msk [vmem:[#allocation5] sm:$0x1] %vm203, %v219
    %233 = vst.msk [vmem:[#allocation6] sm:$0x1] %vm108, %v124
    %v234 = vrcp.pop %v231
    %vm235 = vcmask 0
    %236 = vst.msk [vmem:[#allocation8] sm:$0x1] %vm235, %v234
    // Predicated region
    $region18: #{tpu_custom_call.1} parent=1 // pred_check
      _
    $region19: #{tpu_custom_call.1} parent=1 // pred_check_branch
      %238 = sbr.rel (0) target = $region21
    $region20: #{tpu_custom_call.1} parent=1 // pred_region
      %s240 = ssub.s32 16, 16
      %241 = vsyncadd [#allocation4], %s240
      %s243 = sshll.u32 [#allocation5], 4
      %s244 = int_to_ptr.vmem [resolvable:$true] %s243
      %246 = dma.vmem_to_hbm [thread:$0]  %s244, 16, %s3, [#allocation4]
    $region21: #{tpu_custom_call.1} parent=1 // pred_fallthru
      _
    // Predicated region
    $region22: #{tpu_custom_call.1} parent=1 // pred_check
      _
    $region23: #{tpu_custom_call.1} parent=1 // pred_check_branch
      %248 = sbr.rel (0) target = $region25
    $region24: #{tpu_custom_call.1} parent=1 // pred_region
      %s250 = ssub.s32 16, 16
      %251 = vsyncadd [#allocation7], %s250
      %s253 = sshll.u32 [#allocation6], 4
      %s254 = int_to_ptr.vmem [resolvable:$true] %s253
      %256 = dma.vmem_to_hbm [thread:$0]  %s254, 16, %s4, [#allocation7]
    $region25: #{tpu_custom_call.1} parent=1 // pred_fallthru
      _
    // Predicated region
    $region26: #{tpu_custom_call.1} parent=1 // pred_check
      _
    $region27: #{tpu_custom_call.1} parent=1 // pred_check_branch
      %258 = sbr.rel (0) target = $region29
    $region28: #{tpu_custom_call.1} parent=1 // pred_region
      %s260 = ssub.s32 16, 16
      %261 = vsyncadd [#allocation7], %s260
      %s263 = sshll.u32 [#allocation8], 4
      %s264 = int_to_ptr.vmem [resolvable:$true] %s263
      %266 = dma.vmem_to_hbm [thread:$0]  %s264, 16, %s5, [#allocation7]
    $region29: #{tpu_custom_call.1} parent=1 // pred_fallthru
      _
    // Predicated region
    $region30: #{tpu_custom_call.1} parent=1 // pred_check
      _
    $region31: #{tpu_custom_call.1} parent=1 // pred_check_branch
      %268 = sbr.rel (0) target = $region33
    $region32: #{tpu_custom_call.1} parent=1 // pred_region
      %269 = dma.done [#allocation4], 16
    $region33: #{tpu_custom_call.1} parent=1 // pred_fallthru
      _
    // Predicated region
    $region34: #{tpu_custom_call.1} parent=1 // pred_check
      _
    $region35: #{tpu_custom_call.1} parent=1 // pred_check_branch
      %271 = sbr.rel (0) target = $region37
    $region36: #{tpu_custom_call.1} parent=1 // pred_region
      %272 = dma.done [#allocation7], 16
    $region37: #{tpu_custom_call.1} parent=1 // pred_fallthru
      _
    // Predicated region
    $region38: #{tpu_custom_call.1} parent=1 // pred_check
      _
    $region39: #{tpu_custom_call.1} parent=1 // pred_check_branch
      %274 = sbr.rel (0) target = $region41
    $region40: #{tpu_custom_call.1} parent=1 // pred_region
      %275 = dma.done [#allocation7], 16
    $region41: #{tpu_custom_call.1} parent=1 // pred_fallthru
      _
    %276 = vsyncpa [#allocation3], 1
    %277 = vsyncpa [#allocation4], 1
    %278 = vsyncpa [#allocation7], 1

</llo_original>
